<compile_context>
chip_gen: v7x
topology: tpu7x:2x2x1
jax: 0.10.0
libtpu: 0.0.40
codegen_flags: <defaults>
</compile_context>

<pallas_src>
import jax
import jax.numpy as jnp
from jax.experimental import pallas as pl
from jax.experimental.pallas import tpu as pltpu

# ----------------------------- config (small, deterministic) ------------------
BATCH = 16
INPUT_SIZE = 32
ENCODER_SIZE = 32
ENCODER_DEPTH = 2              # two Linear->ReLU layers (matches kernel body)
PREDICTION_SIZE = 128          # lane-aligned output width

_LOG_CLAMP_LO = 1e-20
_LOG_CLAMP_HI = 1e7

# rows of the packed (8,128) vector-param slab
_ROW_B1, _ROW_B2, _ROW_BD, _ROW_AVAIL = 0, 1, 2, 3


def _sigmoid(v):
    return 1.0 / (1.0 + jnp.exp(-v))


def _safe_log(v):
    # torch_safe_log = log(clamp(x, 1e-20, 1e7))
    return jnp.log(jnp.clip(v, _LOG_CLAMP_LO, _LOG_CLAMP_HI))


def xkcd_kernel(x_ref, w1_ref, w2_ref, wd_ref, vec_ref,
                phi_ref, lws_ref, ws_ref, s0_ref):
    E = ENCODER_SIZE
    x = x_ref[...]                                           # (B, INPUT_SIZE)

    # packed vector params: static sublane rows of the (8,128) slab
    b1 = vec_ref[_ROW_B1:_ROW_B1 + 1, :E]                    # (1, E)
    b2 = vec_ref[_ROW_B2:_ROW_B2 + 1, :E]                    # (1, E)
    bd = vec_ref[_ROW_BD:_ROW_BD + 1, :]                     # (1, P)
    avail = vec_ref[_ROW_AVAIL:_ROW_AVAIL + 1, :]            # (1, P)

    # ---- MLPEncoder: Linear -> ReLU, repeated, final nonlinearity ----
    h = jnp.dot(x, w1_ref[...], preferred_element_type=jnp.float32) + b1
    h = jnp.maximum(h, 0.0)
    h = jnp.dot(h, w2_ref[...], preferred_element_type=jnp.float32) + b2
    h = jnp.maximum(h, 0.0)

    # ---- decoder ----
    phi = jnp.dot(h, wd_ref[...], preferred_element_type=jnp.float32) + bd

    # ---- log word score (log(sigmoid(avail)) computed here; EUP is idle) ----
    log_avail = jnp.log(_sigmoid(avail))                     # (1, P)
    lws = _safe_log(_sigmoid(phi)) + log_avail               # (B, P)

    # ---- word score ----
    ws = jnp.exp(lws)

    # ---- S0 probability: stable softmax (max-subtract, exact divide) ----
    m = jnp.max(lws, axis=-1, keepdims=True)
    e = jnp.exp(lws - m)
    denom = jnp.sum(e, axis=-1, keepdims=True)               # >= 1 by construction
    s0 = e / denom

    phi_ref[...] = phi
    lws_ref[...] = lws
    ws_ref[...] = ws
    s0_ref[...] = s0


def xkcd_forward(x, params):
    B, _ = x.shape
    P = PREDICTION_SIZE

    vmem = pl.BlockSpec(memory_space=pltpu.MemorySpace.VMEM)
    out_sd = jax.ShapeDtypeStruct((B, P), jnp.float32)

    phi, lws, ws, s0 = pl.pallas_call(
        xkcd_kernel,
        out_shape=(out_sd, out_sd, out_sd, out_sd),
        in_specs=[vmem, vmem, vmem, vmem, vmem],
        out_specs=(vmem, vmem, vmem, vmem),
    )(x, params["w1"], params["w2"], params["wd"], params["vec"])

    return {
        "phi_logit": phi,
        "log_word_score": lws,
        "word_score": ws,
        "S0_probability": s0,
    }


def init_params(key):
    ks = jax.random.split(key, 7)
    scale = 0.1
    # weights stored as (in, out) == torch Linear weight transposed
    w1 = scale * jax.random.normal(ks[0], (INPUT_SIZE, ENCODER_SIZE), jnp.float32)
    b1 = scale * jax.random.normal(ks[1], (1, ENCODER_SIZE), jnp.float32)
    w2 = scale * jax.random.normal(ks[2], (ENCODER_SIZE, ENCODER_SIZE), jnp.float32)
    b2 = scale * jax.random.normal(ks[3], (1, ENCODER_SIZE), jnp.float32)
    wd = scale * jax.random.normal(ks[4], (ENCODER_SIZE, PREDICTION_SIZE), jnp.float32)
    bd = scale * jax.random.normal(ks[5], (1, PREDICTION_SIZE), jnp.float32)
    avail = scale * jax.random.normal(ks[6], (1, PREDICTION_SIZE), jnp.float32)

    # Pack the four (1,·) vectors into one (8,128) slab ONCE (one DMA descriptor).
    vec = jnp.zeros((8, PREDICTION_SIZE), jnp.float32)
    vec = vec.at[_ROW_B1, :ENCODER_SIZE].set(b1[0])
    vec = vec.at[_ROW_B2, :ENCODER_SIZE].set(b2[0])
    vec = vec.at[_ROW_BD, :].set(bd[0])
    vec = vec.at[_ROW_AVAIL, :].set(avail[0])

    return {"w1": w1, "w2": w2, "wd": wd, "vec": vec,
            # raw vectors kept only for the pure-JAX reference
            "b1": b1, "b2": b2, "bd": bd, "avail": avail}


def reference_forward(x, p):
    """Pure-JAX reference mirroring the PyTorch module."""
    h = jnp.maximum(x @ p["w1"] + p["b1"], 0.0)
    h = jnp.maximum(h @ p["w2"] + p["b2"], 0.0)
    phi = h @ p["wd"] + p["bd"]
    lws = _safe_log(_sigmoid(phi)) + jnp.log(_sigmoid(p["avail"]))
    ws = jnp.exp(lws)
    s0 = jax.nn.softmax(lws, axis=1)
    return {"phi_logit": phi, "log_word_score": lws,
            "word_score": ws, "S0_probability": s0}


if __name__ == "__main__":
    key = jax.random.PRNGKey(0)
    kx, kp = jax.random.split(key)
    x = jax.random.normal(kx, (BATCH, INPUT_SIZE), jnp.float32)
    params = init_params(kp)

    out = xkcd_forward(x, params)
    jax.block_until_ready(out)

    ref = reference_forward(x, params)
    for name in ("phi_logit", "log_word_score", "word_score", "S0_probability"):
        assert jnp.allclose(out[name], ref[name], atol=1e-5, rtol=1e-5), name

    print("KERNEL_OK")
</pallas_src>

<mosaic_0001>
module attributes {stable_mosaic.version = 11 : i64} {
  func.func @xkcd_kernel(%arg0: memref<16x32xf32, #tpu.memory_space<vmem>>, %arg1: memref<32x32xf32, #tpu.memory_space<vmem>>, %arg2: memref<32x32xf32, #tpu.memory_space<vmem>>, %arg3: memref<32x128xf32, #tpu.memory_space<vmem>>, %arg4: memref<8x128xf32, #tpu.memory_space<vmem>>, %arg5: memref<16x128xf32, #tpu.memory_space<vmem>>, %arg6: memref<16x128xf32, #tpu.memory_space<vmem>>, %arg7: memref<16x128xf32, #tpu.memory_space<vmem>>, %arg8: memref<16x128xf32, #tpu.memory_space<vmem>>) attributes {dimension_semantics = [], scalar_prefetch = 0 : i64, scratch_operands = 0 : i64, tpu.core_type = #tpu.core_type<tc>} {
    %c0 = arith.constant 0 : index
    %c0_0 = arith.constant 0 : index
    %0 = vector.load %arg0[%c0, %c0_0] : memref<16x32xf32, #tpu.memory_space<vmem>>, vector<16x32xf32>
    %c0_1 = arith.constant 0 : index
    %c0_2 = arith.constant 0 : index
    %1 = vector.load %arg4[%c0_1, %c0_2] : memref<8x128xf32, #tpu.memory_space<vmem>>, vector<1x32xf32>
    %c1 = arith.constant 1 : index
    %c0_3 = arith.constant 0 : index
    %2 = vector.load %arg4[%c1, %c0_3] : memref<8x128xf32, #tpu.memory_space<vmem>>, vector<1x32xf32>
    %c2 = arith.constant 2 : index
    %c0_4 = arith.constant 0 : index
    %3 = vector.load %arg4[%c2, %c0_4] : memref<8x128xf32, #tpu.memory_space<vmem>>, vector<1x128xf32>
    %c3 = arith.constant 3 : index
    %c0_5 = arith.constant 0 : index
    %4 = vector.load %arg4[%c3, %c0_5] : memref<8x128xf32, #tpu.memory_space<vmem>>, vector<1x128xf32>
    %c0_6 = arith.constant 0 : index
    %c0_7 = arith.constant 0 : index
    %5 = vector.load %arg1[%c0_6, %c0_7] : memref<32x32xf32, #tpu.memory_space<vmem>>, vector<32x32xf32>
    %cst = arith.constant dense<0.000000e+00> : vector<16x32xf32>
    %6 = tpu.matmul %0, %5, %cst {dimension_numbers = #tpu.dot_dimension_numbers<[1], [0], [0], [1], [0, 0, 1, 1], [], []>} : vector<16x32xf32>, vector<32x32xf32>, vector<16x32xf32> -> vector<16x32xf32>
    %7 = vector.broadcast %1 : vector<1x32xf32> to vector<16x32xf32>
    %8 = arith.addf %6, %7 : vector<16x32xf32>
    %cst_8 = arith.constant 0.000000e+00 : f32
    %9 = vector.broadcast %cst_8 : f32 to vector<16x32xf32>
    %10 = arith.maximumf %8, %9 : vector<16x32xf32>
    %c0_9 = arith.constant 0 : index
    %c0_10 = arith.constant 0 : index
    %11 = vector.load %arg2[%c0_9, %c0_10] : memref<32x32xf32, #tpu.memory_space<vmem>>, vector<32x32xf32>
    %cst_11 = arith.constant dense<0.000000e+00> : vector<16x32xf32>
    %12 = tpu.matmul %10, %11, %cst_11 {dimension_numbers = #tpu.dot_dimension_numbers<[1], [0], [0], [1], [0, 0, 1, 1], [], []>} : vector<16x32xf32>, vector<32x32xf32>, vector<16x32xf32> -> vector<16x32xf32>
    %13 = vector.broadcast %2 : vector<1x32xf32> to vector<16x32xf32>
    %14 = arith.addf %12, %13 : vector<16x32xf32>
    %cst_12 = arith.constant 0.000000e+00 : f32
    %15 = vector.broadcast %cst_12 : f32 to vector<16x32xf32>
    %16 = arith.maximumf %14, %15 : vector<16x32xf32>
    %c0_13 = arith.constant 0 : index
    %c0_14 = arith.constant 0 : index
    %17 = vector.load %arg3[%c0_13, %c0_14] : memref<32x128xf32, #tpu.memory_space<vmem>>, vector<32x128xf32>
    %cst_15 = arith.constant dense<0.000000e+00> : vector<16x128xf32>
    %18 = tpu.matmul %16, %17, %cst_15 {dimension_numbers = #tpu.dot_dimension_numbers<[1], [0], [0], [1], [0, 0, 1, 1], [], []>} : vector<16x32xf32>, vector<32x128xf32>, vector<16x128xf32> -> vector<16x128xf32>
    %19 = vector.broadcast %3 : vector<1x128xf32> to vector<16x128xf32>
    %20 = arith.addf %18, %19 : vector<16x128xf32>
    %cst_16 = arith.constant 0.000000e+00 : f32
    %21 = vector.broadcast %cst_16 : f32 to vector<1x128xf32>
    %22 = arith.subf %21, %4 : vector<1x128xf32>
    %23 = math.exp %22 : vector<1x128xf32>
    %cst_17 = arith.constant 1.000000e+00 : f32
    %24 = vector.broadcast %cst_17 : f32 to vector<1x128xf32>
    %25 = arith.addf %24, %23 : vector<1x128xf32>
    %cst_18 = arith.constant 1.000000e+00 : f32
    %26 = vector.broadcast %cst_18 : f32 to vector<1x128xf32>
    %27 = arith.divf %26, %25 : vector<1x128xf32>
    %28 = math.log %27 : vector<1x128xf32>
    %cst_19 = arith.constant 0.000000e+00 : f32
    %29 = vector.broadcast %cst_19 : f32 to vector<16x128xf32>
    %30 = arith.subf %29, %20 : vector<16x128xf32>
    %31 = math.exp %30 : vector<16x128xf32>
    %cst_20 = arith.constant 1.000000e+00 : f32
    %32 = vector.broadcast %cst_20 : f32 to vector<16x128xf32>
    %33 = arith.addf %32, %31 : vector<16x128xf32>
    %cst_21 = arith.constant 1.000000e+00 : f32
    %34 = vector.broadcast %cst_21 : f32 to vector<16x128xf32>
    %35 = arith.divf %34, %33 : vector<16x128xf32>
    %cst_22 = arith.constant 9.99999968E-21 : f32
    %cst_23 = arith.constant 1.000000e+07 : f32
    %36 = vector.broadcast %cst_22 : f32 to vector<16x128xf32>
    %37 = arith.maximumf %36, %35 : vector<16x128xf32>
    %38 = vector.broadcast %cst_23 : f32 to vector<16x128xf32>
    %39 = arith.minimumf %38, %37 : vector<16x128xf32>
    %40 = math.log %39 : vector<16x128xf32>
    %41 = vector.broadcast %28 : vector<1x128xf32> to vector<16x128xf32>
    %42 = arith.addf %40, %41 : vector<16x128xf32>
    %43 = math.exp %42 : vector<16x128xf32>
    %cst_24 = arith.constant dense<0xFF800000> : vector<16xf32>
    %44 = vector.multi_reduction <maximumf>, %42, %cst_24 [1] : vector<16x128xf32> to vector<16xf32>
    %45 = vector.shape_cast %44 : vector<16xf32> to vector<16x1xf32>
    %46 = vector.broadcast %45 : vector<16x1xf32> to vector<16x128xf32>
    %47 = arith.subf %42, %46 : vector<16x128xf32>
    %48 = math.exp %47 : vector<16x128xf32>
    %cst_25 = arith.constant dense<0.000000e+00> : vector<16xf32>
    %49 = vector.multi_reduction <add>, %48, %cst_25 [1] : vector<16x128xf32> to vector<16xf32>
    %50 = vector.shape_cast %49 : vector<16xf32> to vector<16x1xf32>
    %51 = vector.broadcast %50 : vector<16x1xf32> to vector<16x128xf32>
    %52 = arith.divf %48, %51 : vector<16x128xf32>
    %c0_26 = arith.constant 0 : index
    %c0_27 = arith.constant 0 : index
    %53 = vector.load %arg5[%c0_26, %c0_27] : memref<16x128xf32, #tpu.memory_space<vmem>>, vector<16x128xf32>
    tpu.vector_store %arg5[%c0_26, %c0_27], %20 {strides = array<i32>} : memref<16x128xf32, #tpu.memory_space<vmem>>, vector<16x128xf32>,
    %c0_28 = arith.constant 0 : index
    %c0_29 = arith.constant 0 : index
    %54 = vector.load %arg6[%c0_28, %c0_29] : memref<16x128xf32, #tpu.memory_space<vmem>>, vector<16x128xf32>
    tpu.vector_store %arg6[%c0_28, %c0_29], %42 {strides = array<i32>} : memref<16x128xf32, #tpu.memory_space<vmem>>, vector<16x128xf32>,
    %c0_30 = arith.constant 0 : index
    %c0_31 = arith.constant 0 : index
    %55 = vector.load %arg7[%c0_30, %c0_31] : memref<16x128xf32, #tpu.memory_space<vmem>>, vector<16x128xf32>
    tpu.vector_store %arg7[%c0_30, %c0_31], %43 {strides = array<i32>} : memref<16x128xf32, #tpu.memory_space<vmem>>, vector<16x128xf32>,
    %c0_32 = arith.constant 0 : index
    %c0_33 = arith.constant 0 : index
    %56 = vector.load %arg8[%c0_32, %c0_33] : memref<16x128xf32, #tpu.memory_space<vmem>>, vector<16x128xf32>
    tpu.vector_store %arg8[%c0_32, %c0_33], %52 {strides = array<i32>} : memref<16x128xf32, #tpu.memory_space<vmem>>, vector<16x128xf32>,
    return
  }
}

</mosaic_0001>

<llo_original>
// kernel: tpu_custom_call.1
$region0: #{tpu_custom_call.1}
  #allocation0 [shape = 'u32[]', space=smem, size = 0x4, offset = 0x4, fixed_abs, tag = 'smem constant byte address 0x4 - core index']
  #allocation1 [shape = 'u32[144,128]{1,0:T(1,128)}', space=vmem, size = 0x12000, scoped, tag = 'internal scratch']
  %s0 = inlined_call_operand.hbm [shape: f32[16,32], index: 0, kind: input, shape index: {}]
  %s1 = inlined_call_operand.hbm [shape: f32[32,32], index: 1, kind: input, shape index: {}]
  %s2 = inlined_call_operand.hbm [shape: f32[32,32], index: 2, kind: input, shape index: {}]
  %s3 = inlined_call_operand.hbm [shape: f32[32,128], index: 3, kind: input, shape index: {}]
  %s4 = inlined_call_operand.vmem [shape: f32[8,128], index: 4, kind: input, shape index: {}]
  %s5 = inlined_call_operand.hbm [shape: f32[16,128], index: 5, kind: output, shape index: {0}]
  %s6 = inlined_call_operand.hbm [shape: f32[16,128], index: 6, kind: output, shape index: {1}]
  %s7 = inlined_call_operand.hbm [shape: f32[16,128], index: 7, kind: output, shape index: {2}]
  %s8 = inlined_call_operand.hbm [shape: f32[16,128], index: 8, kind: output, shape index: {3}]
  %9 = xla_tuple %s5, %s6, %s7, %s8
  %s10 = sld [smem:[#allocation0]]
  $region70: #{tpu_custom_call.1} parent=0
    _
  %s12 = ssub.s32 1, %s10
  %s13 = scalar_select 0, %s12, %s10
  $region1: #{tpu_custom_call.1} parent=0
    #allocation2 [shape = 'u8[8192]{0}', space=vmem, size = 0x2000, scoped, tag = 'input window, operand 0, single buffered']
    #allocation3 [shape = 's32[1]{0}', space=sflag, size = 0x4, scoped, tag = 'scoped memory for tpu_custom_call.1']
    #allocation4 [shape = 's32[1]{0}', space=sflag, size = 0x4, scoped, tag = 'scoped memory for tpu_custom_call.1']
    #allocation5 [shape = 'u8[16384]{0}', space=vmem, size = 0x4000, scoped, tag = 'input window, operand 1, single buffered']
    #allocation6 [shape = 's32[1]{0}', space=sflag, size = 0x4, scoped, tag = 'scoped memory for tpu_custom_call.1']
    #allocation7 [shape = 'u8[16384]{0}', space=vmem, size = 0x4000, scoped, tag = 'input window, operand 2, single buffered']
    #allocation8 [shape = 'u8[16384]{0}', space=vmem, size = 0x4000, scoped, tag = 'input window, operand 3, single buffered']
    #allocation9 [shape = 's32[1]{0}', space=sflag, size = 0x4, scoped, tag = 'scoped memory for tpu_custom_call.1']
    #allocation10 [shape = 'u8[8192]{0}', space=vmem, size = 0x2000, scoped, tag = 'output window, operand 0, single buffered']
    #allocation11 [shape = 'u8[8192]{0}', space=vmem, size = 0x2000, scoped, tag = 'output window, operand 1, single buffered']
    #allocation12 [shape = 's32[1]{0}', space=sflag, size = 0x4, scoped, tag = 'scoped memory for tpu_custom_call.1']
    #allocation13 [shape = 'u8[8192]{0}', space=vmem, size = 0x2000, scoped, tag = 'output window, operand 2, single buffered']
    #allocation14 [shape = 'u8[8192]{0}', space=vmem, size = 0x2000, scoped, tag = 'output window, operand 3, single buffered']
    #allocation15 [shape = 's32[1]{0}', space=sflag, size = 0x4, scoped, tag = 'scoped memory for tpu_custom_call.1']
    %14 = vsyncpa [#allocation3], 0
    %15 = vsyncpa [#allocation6], 0
    %16 = vsyncpa [#allocation9], 0
    %17 = vsyncpa [#allocation4], 0
    %18 = vsyncpa [#allocation12], 0
    %19 = vsyncpa [#allocation15], 0
    // Predicated region
    $region2: #{tpu_custom_call.1} parent=1 // pred_check
      _
    $region3: #{tpu_custom_call.1} parent=1 // pred_check_branch
      %21 = sbr.rel (0) target = $region5
    $region4: #{tpu_custom_call.1} parent=1 // pred_region
      %s23 = ssub.s32 256, 256
      %24 = vsyncadd [#allocation3], %s23
      %s25 = sshll.u32 [#allocation2], 4
      %s26 = int_to_ptr.vmem [resolvable:$true] %s25
      %31 = dma.hbm_to_vmem [thread:$0]  %s0, 256, %s26, [#allocation3], 128, 128, 8
    $region5: #{tpu_custom_call.1} parent=1 // pred_fallthru
      _
    // Predicated region
    $region6: #{tpu_custom_call.1} parent=1 // pred_check
      _
    $region7: #{tpu_custom_call.1} parent=1 // pred_check_branch
      %33 = sbr.rel (0) target = $region9
    $region8: #{tpu_custom_call.1} parent=1 // pred_region
      %s35 = ssub.s32 512, 512
      %36 = vsyncadd [#allocation6], %s35
      %s37 = sshll.u32 [#allocation5], 4
      %s38 = int_to_ptr.vmem [resolvable:$true] %s37
      %43 = dma.hbm_to_vmem [thread:$0]  %s1, 512, %s38, [#allocation6], 128, 128, 8
    $region9: #{tpu_custom_call.1} parent=1 // pred_fallthru
      _
    // Predicated region
    $region10: #{tpu_custom_call.1} parent=1 // pred_check
      _
    $region11: #{tpu_custom_call.1} parent=1 // pred_check_branch
      %45 = sbr.rel (0) target = $region13
    $region12: #{tpu_custom_call.1} parent=1 // pred_region
      %s47 = ssub.s32 512, 512
      %48 = vsyncadd [#allocation6], %s47
      %s49 = sshll.u32 [#allocation7], 4
      %s50 = int_to_ptr.vmem [resolvable:$true] %s49
      %55 = dma.hbm_to_vmem [thread:$0]  %s2, 512, %s50, [#allocation6], 128, 128, 8
    $region13: #{tpu_custom_call.1} parent=1 // pred_fallthru
      _
    // Predicated region
    $region14: #{tpu_custom_call.1} parent=1 // pred_check
      _
    $region15: #{tpu_custom_call.1} parent=1 // pred_check_branch
      %57 = sbr.rel (0) target = $region17
    $region16: #{tpu_custom_call.1} parent=1 // pred_region
      %s59 = ssub.s32 512, 512
      %60 = vsyncadd [#allocation9], %s59
      %s61 = sshll.u32 [#allocation8], 4
      %s62 = int_to_ptr.vmem [resolvable:$true] %s61
      %67 = dma.hbm_to_vmem [thread:$0]  %s3, 512, %s62, [#allocation9], 128, 128, 8
    $region17: #{tpu_custom_call.1} parent=1 // pred_fallthru
      _
    // Predicated region
    $region18: #{tpu_custom_call.1} parent=1 // pred_check
      _
    $region19: #{tpu_custom_call.1} parent=1 // pred_check_branch
      %69 = sbr.rel (0) target = $region21
    $region20: #{tpu_custom_call.1} parent=1 // pred_region
      _
    $region21: #{tpu_custom_call.1} parent=1 // pred_fallthru
      _
    // Predicated region
    $region22: #{tpu_custom_call.1} parent=1 // pred_check
      _
    $region23: #{tpu_custom_call.1} parent=1 // pred_check_branch
      %71 = sbr.rel (0) target = $region25
    $region24: #{tpu_custom_call.1} parent=1 // pred_region
      %72 = dma.done [#allocation3], 256
    $region25: #{tpu_custom_call.1} parent=1 // pred_fallthru
      _
    // Predicated region
    $region26: #{tpu_custom_call.1} parent=1 // pred_check
      _
    $region27: #{tpu_custom_call.1} parent=1 // pred_check_branch
      %74 = sbr.rel (0) target = $region29
    $region28: #{tpu_custom_call.1} parent=1 // pred_region
      %75 = dma.done [#allocation6], 512
    $region29: #{tpu_custom_call.1} parent=1 // pred_fallthru
      _
    // Predicated region
    $region30: #{tpu_custom_call.1} parent=1 // pred_check
      _
    $region31: #{tpu_custom_call.1} parent=1 // pred_check_branch
      %77 = sbr.rel (0) target = $region33
    $region32: #{tpu_custom_call.1} parent=1 // pred_region
      %78 = dma.done [#allocation6], 512
    $region33: #{tpu_custom_call.1} parent=1 // pred_fallthru
      _
    // Predicated region
    $region34: #{tpu_custom_call.1} parent=1 // pred_check
      _
    $region35: #{tpu_custom_call.1} parent=1 // pred_check_branch
      %80 = sbr.rel (0) target = $region37
    $region36: #{tpu_custom_call.1} parent=1 // pred_region
      %81 = dma.done [#allocation9], 512
    $region37: #{tpu_custom_call.1} parent=1 // pred_fallthru
      _
    %v82 = vld [vmem:[#allocation2] sm:$0xff]
    %v83 = vld [vmem:[#allocation2 + $0x8] sm:$0xff]
    %v84 = vld [vmem:[%s4] sm:$0x1]
    %v85 = vld [vmem:[%s4 + $0x1] sm:$0x1]
    %v86 = vld [vmem:[%s4 + $0x2] sm:$0x1]
    %v87 = vld [vmem:[%s4 + $0x3] sm:$0x1]
    %v88 = vld [vmem:[#allocation5] sm:$0xff]
    %v89 = vld [vmem:[#allocation5 + $0x8] sm:$0xff]
    %v90 = vld [vmem:[#allocation5 + $0x10] sm:$0xff]
    %v91 = vld [vmem:[#allocation5 + $0x18] sm:$0xff]
    %v92 = vlaneseq
    %v93 = vshrl.u32 %v92, 7
    %v94 = vsub.s32 0, %v93
    %v95 = vrot.slane %v84, %v94
    %vm96 = vcmask 261120
    %v98 = vsel %vm96, %v82, 0
    %v101 = vsel %vm96, %v83, 0
    %103 = vmatprep.subr.mxu0 0.0
    %104 = vmatpush1.msra.mxu0 %v88
    %105 = vmatprep.subr.mxu0 0.0
    %106 = vmatpush1.msra.mxu0 %v89
    %107 = vmatprep.subr.mxu0 0.0
    %108 = vmatpush1.msra.mxu0 %v90
    %109 = vmatprep.subr.mxu0 0.0
    %110 = vmatpush1.msra.mxu0 %v91
    %111 = vmatprep.subr.mxu0 0.0
    %112 = vmatpush1.msra.mxu0 0.0
    %113 = vmatprep.subr.mxu0 0.0
    %114 = vmatpush1.msra.mxu0 0.0
    %115 = vmatprep.subr.mxu0 0.0
    %116 = vmatpush1.msra.mxu0 0.0
    %117 = vmatprep.subr.mxu0 0.0
    %118 = vmatpush1.msra.mxu0 0.0
    %119 = vmatprep.subr.mxu0 0.0
    %120 = vmatpush1.msra.mxu0 0.0
    %121 = vmatprep.subr.mxu0 0.0
    %122 = vmatpush1.msra.mxu0 0.0
    %123 = vmatprep.subr.mxu0 0.0
    %124 = vmatpush1.msra.mxu0 0.0
    %125 = vmatprep.subr.mxu0 0.0
    %126 = vmatpush1.msra.mxu0 0.0
    %127 = vmatprep.subr.mxu0 0.0
    %128 = vmatpush1.msra.mxu0 0.0
    %129 = vmatprep.subr.mxu0 0.0
    %130 = vmatpush1.msra.mxu0 0.0
    %131 = vmatprep.subr.mxu0 0.0
    %132 = vmatpush1.msra.mxu0 0.0
    %133 = vmatprep.subr.mxu0 0.0
    %134 = vmatpush1.msra.mxu0 0.0
    %135 = vmatprep.subr.mxu0 0.0
    %136 = vmatpush1.msra.mxu0 0.0
    %137 = vmatprep.subr.mxu0 0.0
    %138 = vmatpush1.msra.mxu0 0.0
    %139 = vmatprep.subr.mxu0 0.0
    %140 = vmatpush1.msra.mxu0 0.0
    %141 = vmatprep.subr.mxu0 0.0
    %142 = vmatpush1.msra.mxu0 0.0
    %143 = vmatprep.subr.mxu0 0.0
    %144 = vmatpush1.msra.mxu0 0.0
    %145 = vmatprep.subr.mxu0 0.0
    %146 = vmatpush1.msra.mxu0 0.0
    %147 = vmatprep.subr.mxu0 0.0
    %148 = vmatpush1.msra.mxu0 0.0
    %149 = vmatprep.subr.mxu0 0.0
    %150 = vmatpush1.msra.mxu0 0.0
    %151 = vmatprep.subr.mxu0 0.0
    %152 = vmatpush1.msra.mxu0 0.0
    %153 = vmatprep.subr.mxu0 0.0
    %154 = vmatpush1.msra.mxu0 0.0
    %155 = vmatprep.subr.mxu0 0.0
    %156 = vmatpush1.msra.mxu0 0.0
    %157 = vmatprep.subr.mxu0 0.0
    %158 = vmatpush1.msra.mxu0 0.0
    %159 = vmatprep.subr.mxu0 0.0
    %160 = vmatpush1.msra.mxu0 0.0
    %161 = vmatprep.subr.mxu0 0.0
    %162 = vmatpush1.msra.mxu0 0.0
    %163 = vmatprep.subr.mxu0 0.0
    %164 = vmatpush1.msra.mxu0 0.0
    %165 = vmatprep.subr.mxu0 0.0
    %166 = vmatpush1.msra.mxu0 0.0
    %167 = vmatprep.mubr.f32.mxu0 0.0
    %168 = vmatmul.mubr.f32.gmra.mrb[0].mxu0 %v98
    %v169 = vpop.f32.mrb[0].mxu0
    %v170 = vadd.f32 %v95, %v169
    %v171 = vpop.f32.mrb[0].mxu0
    %172 = vmatprep.mubr.f32.mxu0 0.0
    %173 = vmatmul.mubr.f32.gmra.mrb[0].mxu0 %v101
    %v174 = vpop.f32.mrb[0].mxu0
    %v175 = vadd.f32 %v95, %v174
    %v176 = vpop.f32.mrb[0].mxu0
    %177 = vdwg.mxu0
    %v178 = vmax.f32 %v170, 0.0
    %v179 = vmax.f32 %v175, 0.0
    %v180 = vld [vmem:[#allocation7] sm:$0xff]
    %v181 = vld [vmem:[#allocation7 + $0x8] sm:$0xff]
    %v182 = vld [vmem:[#allocation7 + $0x10] sm:$0xff]
    %v183 = vld [vmem:[#allocation7 + $0x18] sm:$0xff]
    %v184 = vlaneseq
    %v185 = vshrl.u32 %v184, 7
    %v186 = vsub.s32 0, %v185
    %v187 = vrot.slane %v85, %v186
    %v189 = vsel %vm96, %v178, 0
    %v192 = vsel %vm96, %v179, 0
    %194 = vmatprep.subr.mxu0 0.0
    %195 = vmatpush1.msra.mxu0 %v180
    %196 = vmatprep.subr.mxu0 0.0
    %197 = vmatpush1.msra.mxu0 %v181
    %198 = vmatprep.subr.mxu0 0.0
    %199 = vmatpush1.msra.mxu0 %v182
    %200 = vmatprep.subr.mxu0 0.0
    %201 = vmatpush1.msra.mxu0 %v183
    %202 = vmatprep.subr.mxu0 0.0
    %203 = vmatpush1.msra.mxu0 0.0
    %204 = vmatprep.subr.mxu0 0.0
    %205 = vmatpush1.msra.mxu0 0.0
    %206 = vmatprep.subr.mxu0 0.0
    %207 = vmatpush1.msra.mxu0 0.0
    %208 = vmatprep.subr.mxu0 0.0
    %209 = vmatpush1.msra.mxu0 0.0
    %210 = vmatprep.subr.mxu0 0.0
    %211 = vmatpush1.msra.mxu0 0.0
    %212 = vmatprep.subr.mxu0 0.0
    %213 = vmatpush1.msra.mxu0 0.0
    %214 = vmatprep.subr.mxu0 0.0
    %215 = vmatpush1.msra.mxu0 0.0
    %216 = vmatprep.subr.mxu0 0.0
    %217 = vmatpush1.msra.mxu0 0.0
    %218 = vmatprep.subr.mxu0 0.0
    %219 = vmatpush1.msra.mxu0 0.0
    %220 = vmatprep.subr.mxu0 0.0
    %221 = vmatpush1.msra.mxu0 0.0
    %222 = vmatprep.subr.mxu0 0.0
    %223 = vmatpush1.msra.mxu0 0.0
    %224 = vmatprep.subr.mxu0 0.0
    %225 = vmatpush1.msra.mxu0 0.0
    %226 = vmatprep.subr.mxu0 0.0
    %227 = vmatpush1.msra.mxu0 0.0
    %228 = vmatprep.subr.mxu0 0.0
    %229 = vmatpush1.msra.mxu0 0.0
    %230 = vmatprep.subr.mxu0 0.0
    %231 = vmatpush1.msra.mxu0 0.0
    %232 = vmatprep.subr.mxu0 0.0
    %233 = vmatpush1.msra.mxu0 0.0
    %234 = vmatprep.subr.mxu0 0.0
    %235 = vmatpush1.msra.mxu0 0.0
    %236 = vmatprep.subr.mxu0 0.0
    %237 = vmatpush1.msra.mxu0 0.0
    %238 = vmatprep.subr.mxu0 0.0
    %239 = vmatpush1.msra.mxu0 0.0
    %240 = vmatprep.subr.mxu0 0.0
    %241 = vmatpush1.msra.mxu0 0.0
    %242 = vmatprep.subr.mxu0 0.0
    %243 = vmatpush1.msra.mxu0 0.0
    %244 = vmatprep.subr.mxu0 0.0
    %245 = vmatpush1.msra.mxu0 0.0
    %246 = vmatprep.subr.mxu0 0.0
    %247 = vmatpush1.msra.mxu0 0.0
    %248 = vmatprep.subr.mxu0 0.0
    %249 = vmatpush1.msra.mxu0 0.0
    %250 = vmatprep.subr.mxu0 0.0
    %251 = vmatpush1.msra.mxu0 0.0
    %252 = vmatprep.subr.mxu0 0.0
    %253 = vmatpush1.msra.mxu0 0.0
    %254 = vmatprep.subr.mxu0 0.0
    %255 = vmatpush1.msra.mxu0 0.0
    %256 = vmatprep.subr.mxu0 0.0
    %257 = vmatpush1.msra.mxu0 0.0
    %258 = vmatprep.mubr.f32.mxu0 0.0
    %259 = vmatmul.mubr.f32.gmra.mrb[0].mxu0 %v189
    %v260 = vpop.f32.mrb[0].mxu0
    %v261 = vadd.f32 %v187, %v260
    %v262 = vpop.f32.mrb[0].mxu0
    %263 = vmatprep.mubr.f32.mxu0 0.0
    %264 = vmatmul.mubr.f32.gmra.mrb[0].mxu0 %v192
    %v265 = vpop.f32.mrb[0].mxu0
    %v266 = vadd.f32 %v187, %v265
    %v267 = vpop.f32.mrb[0].mxu0
    %268 = vdwg.mxu0
    %v269 = vmax.f32 %v261, 0.0
    %v270 = vmax.f32 %v266, 0.0
    %v271 = vld [vmem:[#allocation8] sm:$0xff]
    %v272 = vld [vmem:[#allocation8 + $0x8] sm:$0xff]
    %v273 = vld [vmem:[#allocation8 + $0x10] sm:$0xff]
    %v274 = vld [vmem:[#allocation8 + $0x18] sm:$0xff]
    %v275 = vlaneseq
    %v276 = vshrl.u32 %v275, 7
    %v277 = vsub.s32 0, %v276
    %v278 = vrot.slane %v86, %v277
    %v280 = vsel %vm96, %v269, 0
    %v283 = vsel %vm96, %v270, 0
    %285 = vmatprep.subr.mxu0 0.0
    %286 = vmatpush1.msra.mxu0 %v271
    %287 = vmatprep.subr.mxu0 0.0
    %288 = vmatpush1.msra.mxu0 %v272
    %289 = vmatprep.subr.mxu0 0.0
    %290 = vmatpush1.msra.mxu0 %v273
    %291 = vmatprep.subr.mxu0 0.0
    %292 = vmatpush1.msra.mxu0 %v274
    %293 = vmatprep.subr.mxu0 0.0
    %294 = vmatpush1.msra.mxu0 0.0
    %295 = vmatprep.subr.mxu0 0.0
    %296 = vmatpush1.msra.mxu0 0.0
    %297 = vmatprep.subr.mxu0 0.0
    %298 = vmatpush1.msra.mxu0 0.0
    %299 = vmatprep.subr.mxu0 0.0
    %300 = vmatpush1.msra.mxu0 0.0
    %301 = vmatprep.subr.mxu0 0.0
    %302 = vmatpush1.msra.mxu0 0.0
    %303 = vmatprep.subr.mxu0 0.0
    %304 = vmatpush1.msra.mxu0 0.0
    %305 = vmatprep.subr.mxu0 0.0
    %306 = vmatpush1.msra.mxu0 0.0
    %307 = vmatprep.subr.mxu0 0.0
    %308 = vmatpush1.msra.mxu0 0.0
    %309 = vmatprep.subr.mxu0 0.0
    %310 = vmatpush1.msra.mxu0 0.0
    %311 = vmatprep.subr.mxu0 0.0
    %312 = vmatpush1.msra.mxu0 0.0
    %313 = vmatprep.subr.mxu0 0.0
    %314 = vmatpush1.msra.mxu0 0.0
    %315 = vmatprep.subr.mxu0 0.0
    %316 = vmatpush1.msra.mxu0 0.0
    %317 = vmatprep.subr.mxu0 0.0
    %318 = vmatpush1.msra.mxu0 0.0
    %319 = vmatprep.subr.mxu0 0.0
    %320 = vmatpush1.msra.mxu0 0.0
    %321 = vmatprep.subr.mxu0 0.0
    %322 = vmatpush1.msra.mxu0 0.0
    %323 = vmatprep.subr.mxu0 0.0
    %324 = vmatpush1.msra.mxu0 0.0
    %325 = vmatprep.subr.mxu0 0.0
    %326 = vmatpush1.msra.mxu0 0.0
    %327 = vmatprep.subr.mxu0 0.0
    %328 = vmatpush1.msra.mxu0 0.0
    %329 = vmatprep.subr.mxu0 0.0
    %330 = vmatpush1.msra.mxu0 0.0
    %331 = vmatprep.subr.mxu0 0.0
    %332 = vmatpush1.msra.mxu0 0.0
    %333 = vmatprep.subr.mxu0 0.0
    %334 = vmatpush1.msra.mxu0 0.0
    %335 = vmatprep.subr.mxu0 0.0
    %336 = vmatpush1.msra.mxu0 0.0
    %337 = vmatprep.subr.mxu0 0.0
    %338 = vmatpush1.msra.mxu0 0.0
    %339 = vmatprep.subr.mxu0 0.0
    %340 = vmatpush1.msra.mxu0 0.0
    %341 = vmatprep.subr.mxu0 0.0
    %342 = vmatpush1.msra.mxu0 0.0
    %343 = vmatprep.subr.mxu0 0.0
    %344 = vmatpush1.msra.mxu0 0.0
    %345 = vmatprep.subr.mxu0 0.0
    %346 = vmatpush1.msra.mxu0 0.0
    %347 = vmatprep.subr.mxu0 0.0
    %348 = vmatpush1.msra.mxu0 0.0
    %349 = vmatprep.mubr.f32.mxu0 0.0
    %350 = vmatmul.mubr.f32.gmra.mrb[0].mxu0 %v280
    %v351 = vpop.f32.mrb[0].mxu0
    %v352 = vadd.f32 %v278, %v351
    %v353 = vpop.f32.mrb[0].mxu0
    %354 = vmatprep.mubr.f32.mxu0 0.0
    %355 = vmatmul.mubr.f32.gmra.mrb[0].mxu0 %v283
    %v356 = vpop.f32.mrb[0].mxu0
    %v357 = vadd.f32 %v278, %v356
    %v358 = vpop.f32.mrb[0].mxu0
    %359 = vdwg.mxu0
    %v360 = vsub.f32 0.0, %v87
    %v361 = vmul.f32 %v360, 1.442695
    %v362 = vpow.pop %v361
    %v363 = vadd.f32 %v362, 1.0
    %v364 = vrcp.pop %v363
    %v365 = vmul.f32 1.0, %v364
    %v366 = vlog2.pop %v365
    %v367 = vmul.f32 %v366, 0.6931472
    %v368 = vsub.f32 0.0, %v352
    %v369 = vsub.f32 0.0, %v357
    %v370 = vmul.f32 %v368, 1.442695
    %v371 = vpow.pop %v370
    %v372 = vmul.f32 %v369, 1.442695
    %v373 = vpow.pop %v372
    %v374 = vadd.f32 %v371, 1.0
    %v375 = vadd.f32 %v373, 1.0
    %v376 = vrcp.pop %v374
    %v377 = vmul.f32 1.0, %v376
    %v378 = vrcp.pop %v375
    %v379 = vmul.f32 1.0, %v378
    %v380 = vmax.f32 %v377, 1e-20
    %v381 = vmax.f32 %v379, 1e-20
    %v382 = vmin.f32 %v380, 10000000.0
    %v383 = vmin.f32 %v381, 10000000.0
    %v384 = vlog2.pop %v382
    %v385 = vmul.f32 %v384, 0.6931472
    %v386 = vlog2.pop %v383
    %v387 = vmul.f32 %v386, 0.6931472
    %v388 = vlaneseq
    %v389 = vshrl.u32 %v388, 7
    %v390 = vsub.s32 0, %v389
    %v391 = vrot.slane %v367, %v390
    %v392 = vadd.f32 %v385, %v391
    %v393 = vadd.f32 %v387, %v391
    %v394 = vmul.f32 %v392, 1.442695
    %v395 = vpow.pop %v394
    %v396 = vmul.f32 %v393, 1.442695
    %v397 = vpow.pop %v396
    %398 = vmax.xlane.f32.xlu0 %v392
    %v399 = vpop.xlane.xlu0 %398
    %400 = vmax.xlane.f32.xlu0 %v393
    %v401 = vpop.xlane.xlu0 %400
    %v402 = vsub.f32 %v392, %v399
    %v403 = vsub.f32 %v393, %v401
    %v404 = vmul.f32 %v402, 1.442695
    %v405 = vpow.pop %v404
    %v406 = vmul.f32 %v403, 1.442695
    %v407 = vpow.pop %v406
    %408 = vadd.xlane.f32.xlu0 %v405
    %v409 = vpop.xlane.xlu0 %408
    %410 = vadd.xlane.f32.xlu0 %v407
    %v411 = vpop.xlane.xlu0 %410
    %v412 = vrcp.pop %v409
    %v413 = vmul.f32 %v405, %v412
    %v414 = vrcp.pop %v411
    %v415 = vmul.f32 %v407, %v414
    %416 = vst [vmem:[#allocation10] sm:$0xff] %v352
    %417 = vst [vmem:[#allocation10 + $0x8] sm:$0xff] %v357
    %418 = vst [vmem:[#allocation11] sm:$0xff] %v392
    %419 = vst [vmem:[#allocation11 + $0x8] sm:$0xff] %v393
    %420 = vst [vmem:[#allocation13] sm:$0xff] %v395
    %421 = vst [vmem:[#allocation13 + $0x8] sm:$0xff] %v397
    %422 = vst [vmem:[#allocation14] sm:$0xff] %v413
    %423 = vst [vmem:[#allocation14 + $0x8] sm:$0xff] %v415
    // Predicated region
    $region38: #{tpu_custom_call.1} parent=1 // pred_check
      _
    $region39: #{tpu_custom_call.1} parent=1 // pred_check_branch
      %425 = sbr.rel (0) target = $region41
    $region40: #{tpu_custom_call.1} parent=1 // pred_region
      %s427 = ssub.s32 256, 256
      %428 = vsyncadd [#allocation4], %s427
      %s429 = sshll.u32 [#allocation10], 4
      %s430 = int_to_ptr.vmem [resolvable:$true] %s429
      %435 = dma.vmem_to_hbm [thread:$0]  %s430, 256, %s5, [#allocation4], 128, 128, 8
    $region41: #{tpu_custom_call.1} parent=1 // pred_fallthru
      _
    // Predicated region
    $region42: #{tpu_custom_call.1} parent=1 // pred_check
      _
    $region43: #{tpu_custom_call.1} parent=1 // pred_check_branch
      %437 = sbr.rel (0) target = $region45
    $region44: #{tpu_custom_call.1} parent=1 // pred_region
      %s439 = ssub.s32 256, 256
      %440 = vsyncadd [#allocation12], %s439
      %s441 = sshll.u32 [#allocation11], 4
      %s442 = int_to_ptr.vmem [resolvable:$true] %s441
      %447 = dma.vmem_to_hbm [thread:$0]  %s442, 256, %s6, [#allocation12], 128, 128, 8
    $region45: #{tpu_custom_call.1} parent=1 // pred_fallthru
      _
    // Predicated region
    $region46: #{tpu_custom_call.1} parent=1 // pred_check
      _
    $region47: #{tpu_custom_call.1} parent=1 // pred_check_branch
      %449 = sbr.rel (0) target = $region49
    $region48: #{tpu_custom_call.1} parent=1 // pred_region
      %s451 = ssub.s32 256, 256
      %452 = vsyncadd [#allocation12], %s451
      %s453 = sshll.u32 [#allocation13], 4
      %s454 = int_to_ptr.vmem [resolvable:$true] %s453
      %459 = dma.vmem_to_hbm [thread:$0]  %s454, 256, %s7, [#allocation12], 128, 128, 8
    $region49: #{tpu_custom_call.1} parent=1 // pred_fallthru
      _
    // Predicated region
    $region50: #{tpu_custom_call.1} parent=1 // pred_check
      _
    $region51: #{tpu_custom_call.1} parent=1 // pred_check_branch
      %461 = sbr.rel (0) target = $region53
    $region52: #{tpu_custom_call.1} parent=1 // pred_region
      %s463 = ssub.s32 256, 256
      %464 = vsyncadd [#allocation15], %s463
      %s465 = sshll.u32 [#allocation14], 4
      %s466 = int_to_ptr.vmem [resolvable:$true] %s465
      %471 = dma.vmem_to_hbm [thread:$0]  %s466, 256, %s8, [#allocation15], 128, 128, 8
    $region53: #{tpu_custom_call.1} parent=1 // pred_fallthru
      _
    // Predicated region
    $region54: #{tpu_custom_call.1} parent=1 // pred_check
      _
    $region55: #{tpu_custom_call.1} parent=1 // pred_check_branch
      %473 = sbr.rel (0) target = $region57
    $region56: #{tpu_custom_call.1} parent=1 // pred_region
      %474 = dma.done [#allocation4], 256
    $region57: #{tpu_custom_call.1} parent=1 // pred_fallthru
      _
    // Predicated region
    $region58: #{tpu_custom_call.1} parent=1 // pred_check
      _
    $region59: #{tpu_custom_call.1} parent=1 // pred_check_branch
      %476 = sbr.rel (0) target = $region61
    $region60: #{tpu_custom_call.1} parent=1 // pred_region
      %477 = dma.done [#allocation12], 256
    $region61: #{tpu_custom_call.1} parent=1 // pred_fallthru
      _
    // Predicated region
    $region62: #{tpu_custom_call.1} parent=1 // pred_check
      _
    $region63: #{tpu_custom_call.1} parent=1 // pred_check_branch
      %479 = sbr.rel (0) target = $region65
    $region64: #{tpu_custom_call.1} parent=1 // pred_region
      %480 = dma.done [#allocation12], 256
    $region65: #{tpu_custom_call.1} parent=1 // pred_fallthru
      _
    // Predicated region
    $region66: #{tpu_custom_call.1} parent=1 // pred_check
      _
    $region67: #{tpu_custom_call.1} parent=1 // pred_check_branch
      %482 = sbr.rel (0) target = $region69
    $region68: #{tpu_custom_call.1} parent=1 // pred_region
      %483 = dma.done [#allocation15], 256
    $region69: #{tpu_custom_call.1} parent=1 // pred_fallthru
      _
    %484 = vsyncpa [#allocation3], 1
    %485 = vsyncpa [#allocation6], 1
    %486 = vsyncpa [#allocation9], 1
    %487 = vsyncpa [#allocation4], 1
    %488 = vsyncpa [#allocation12], 1
    %489 = vsyncpa [#allocation15], 1

</llo_original>
